<compile_context>
chip_gen: v6e
topology: v6e:2x2x1
jax: 0.10.0
libtpu: 0.0.40
codegen_flags: <defaults>
</compile_context>

<pallas_src>
import functools

import jax
import jax.numpy as jnp
from jax.experimental import pallas as pl
from jax.experimental.pallas import tpu as pltpu


def resblock_kernel(slab1_ref, x_ref, w1_ref, g1_ref, be1_ref,
                    w2_ref, g2_ref, be2_ref, out_ref, slab2_ref,
                    *, C, L, NL, kW, pad, eps):
    inv_cnt = 1.0 / float(NL)

    def batchnorm(y, g_ref, be_ref):
        # One-pass batch stats per channel over all N*L columns (biased variance).
        mean = jnp.sum(y, axis=1, keepdims=True) * inv_cnt
        msq = jnp.sum(y * y, axis=1, keepdims=True) * inv_cnt
        var = msq - mean * mean
        return (y - mean) * jax.lax.rsqrt(var + eps) * g_ref[...] + be_ref[...]

    # conv1: one (C, kW*C) @ (kW*C, N*L) MXU matmul -> BN1 -> ReLU.
    y1 = jnp.dot(w1_ref[...], slab1_ref[...], preferred_element_type=jnp.float32)
    h = jnp.maximum(batchnorm(y1, g1_ref, be1_ref), 0.0)

    # conv2 (dilation 1, "same" padding): build the shifted-tap slab of h in a VMEM
    # scratch.  Columns are f = n*L + l; per-sample zero padding is enforced by masking
    # taps that would cross a sample boundary (l + off outside [0, L)).
    lane_l = jax.lax.broadcasted_iota(jnp.int32, (1, NL), 1) % L
    for k in range(kW):
        off = k - pad
        if off == 0:
            slab2_ref[k * C:(k + 1) * C, :] = h
        else:
            if off > 0:
                hk = jnp.concatenate(
                    [h[:, off:], jnp.zeros((C, off), jnp.float32)], axis=1)
            else:
                hk = jnp.concatenate(
                    [jnp.zeros((C, -off), jnp.float32), h[:, :off]], axis=1)
            valid = jnp.logical_and(lane_l + off >= 0, lane_l + off < L)
            slab2_ref[k * C:(k + 1) * C, :] = jnp.where(valid, hk, 0.0)

    # conv2 matmul -> BN2 -> residual add -> ReLU (lane-dense store).
    y2 = jnp.dot(w2_ref[...], slab2_ref[...], preferred_element_type=jnp.float32)
    h2 = batchnorm(y2, g2_ref, be2_ref)
    out_ref[...] = jnp.maximum(x_ref[...] + h2, 0.0)


def resblock_forward(x, params, *, kW, dil, eps=1e-5):
    N, C, L = x.shape
    pad = (kW - 1) // 2
    M = pad * dil
    NL = N * L

    # --- wrapper-side layout plumbing (plain XLA, outside the kernel) ---
    # conv1 shifted-tap slab: slab1[k*C + i, n*L + l] = xpad[n, i, l + k*dil]
    xp = jnp.pad(x, ((0, 0), (0, 0), (M, M)))                                  # (N,C,L+2M)
    taps = jnp.stack([xp[:, :, k * dil:k * dil + L] for k in range(kW)], 0)    # (kW,N,C,L)
    slab1 = jnp.transpose(taps, (0, 2, 1, 3)).reshape(kW * C, NL)              # (kW*C, N*L)

    # residual input, channels-first lane-dense
    x2d = jnp.transpose(x, (1, 0, 2)).reshape(C, NL)                           # (C, N*L)

    # weight slabs: wslab[o, k*C + i] = w[o, i, k]
    w1s = jnp.transpose(params['w1'], (0, 2, 1)).reshape(C, kW * C)
    w2s = jnp.transpose(params['w2'], (0, 2, 1)).reshape(C, kW * C)

    # conv biases (params['b1'], params['b2']) are mathematically dead: they are constant
    # per channel over (N, L) and cancel in the batch-stat BN mean subtraction.

    g1, be1 = params['g1'][:, None], params['be1'][:, None]
    g2, be2 = params['g2'][:, None], params['be2'][:, None]

    kernel = functools.partial(resblock_kernel, C=C, L=L, NL=NL, kW=kW,
                               pad=pad, eps=eps)
    vmem = pl.BlockSpec(memory_space=pltpu.MemorySpace.VMEM)
    out2d = pl.pallas_call(
        kernel,
        out_shape=jax.ShapeDtypeStruct((C, NL), jnp.float32),
        in_specs=[vmem] * 8,
        out_specs=vmem,
        scratch_shapes=[pltpu.VMEM((kW * C, NL), jnp.float32)],
    )(slab1, x2d, w1s, g1, be1, w2s, g2, be2)

    return jnp.transpose(out2d.reshape(C, N, L), (1, 0, 2))                    # (N, C, L)


def resblock_ref(x, params, *, kW, dil, eps=1e-5):
    pad = (kW - 1) // 2

    def conv1d(xx, w, b, p, d):
        y = jax.lax.conv_general_dilated(
            xx, w, window_strides=(1,), padding=[(p, p)], rhs_dilation=(d,),
            dimension_numbers=('NCH', 'OIH', 'NCH'))
        return y + b[None, :, None]

    def bn(y, g, be):
        mean = jnp.mean(y, axis=(0, 2), keepdims=True)
        var = jnp.mean((y - mean) ** 2, axis=(0, 2), keepdims=True)
        return (y - mean) * jax.lax.rsqrt(var + eps) * g[None, :, None] + be[None, :, None]

    h = jax.nn.relu(bn(conv1d(x, params['w1'], params['b1'], pad * dil, dil),
                       params['g1'], params['be1']))
    h2 = bn(conv1d(h, params['w2'], params['b2'], pad, 1),
            params['g2'], params['be2'])
    return jax.nn.relu(x + h2)


if __name__ == "__main__":
    # opt.q_hid_size = 32, opt.kW = 3, dil = 2, dim = 1 (Conv1d branch); L chosen so that
    # N*L = 128 makes the kernel's lane dimension fully dense.
    N, C, L, kW, dil = 2, 32, 64, 3, 2

    key = jax.random.PRNGKey(0)
    kx, k1, k2, k3, k4 = jax.random.split(key, 5)
    x = jax.random.normal(kx, (N, C, L), jnp.float32)

    params = {
        'w1': jax.random.normal(k1, (C, C, kW), jnp.float32) * 0.1,
        'b1': jax.random.normal(k2, (C,), jnp.float32) * 0.1,
        'g1': jnp.ones((C,), jnp.float32),
        'be1': jnp.zeros((C,), jnp.float32),
        'w2': jax.random.normal(k3, (C, C, kW), jnp.float32) * 0.1,
        'b2': jax.random.normal(k4, (C,), jnp.float32) * 0.1,
        'g2': jnp.ones((C,), jnp.float32),
        'be2': jnp.zeros((C,), jnp.float32),
    }

    out = jax.jit(functools.partial(resblock_forward, kW=kW, dil=dil))(x, params)
    out = jax.block_until_ready(out)

    ref = resblock_ref(x, params, kW=kW, dil=dil)
    assert out.shape == (N, C, L)
    assert jnp.allclose(out, ref, atol=1e-4, rtol=1e-4), \
        f"max abs err {jnp.max(jnp.abs(out - ref))}"

    print("KERNEL_OK")
</pallas_src>

<mosaic_0001>
module attributes {stable_mosaic.version = 11 : i64} {
  func.func @resblock_kernel(%arg0: memref<96x128xf32, #tpu.memory_space<vmem>>, %arg1: memref<32x128xf32, #tpu.memory_space<vmem>>, %arg2: memref<32x96xf32, #tpu.memory_space<vmem>>, %arg3: memref<32x1xf32, #tpu.memory_space<vmem>>, %arg4: memref<32x1xf32, #tpu.memory_space<vmem>>, %arg5: memref<32x96xf32, #tpu.memory_space<vmem>>, %arg6: memref<32x1xf32, #tpu.memory_space<vmem>>, %arg7: memref<32x1xf32, #tpu.memory_space<vmem>>, %arg8: memref<32x128xf32, #tpu.memory_space<vmem>>, %arg9: memref<96x128xf32, #tpu.memory_space<vmem>>) attributes {dimension_semantics = [], scalar_prefetch = 0 : i64, scratch_operands = 1 : i64, tpu.core_type = #tpu.core_type<tc>} {
    %c0 = arith.constant 0 : index
    %c0_0 = arith.constant 0 : index
    %0 = vector.load %arg2[%c0, %c0_0] : memref<32x96xf32, #tpu.memory_space<vmem>>, vector<32x96xf32>
    %c0_1 = arith.constant 0 : index
    %c0_2 = arith.constant 0 : index
    %1 = vector.load %arg0[%c0_1, %c0_2] : memref<96x128xf32, #tpu.memory_space<vmem>>, vector<96x128xf32>
    %cst = arith.constant dense<0.000000e+00> : vector<32x128xf32>
    %2 = tpu.matmul %0, %1, %cst {dimension_numbers = #tpu.dot_dimension_numbers<[1], [0], [0], [1], [0, 0, 1, 1], [], []>} : vector<32x96xf32>, vector<96x128xf32>, vector<32x128xf32> -> vector<32x128xf32>
    %cst_3 = arith.constant dense<0.000000e+00> : vector<32xf32>
    %3 = vector.multi_reduction <add>, %2, %cst_3 [1] : vector<32x128xf32> to vector<32xf32>
    %4 = vector.shape_cast %3 : vector<32xf32> to vector<32x1xf32>
    %cst_4 = arith.constant 7.812500e-03 : f32
    %5 = vector.broadcast %cst_4 : f32 to vector<32x1xf32>
    %6 = arith.mulf %4, %5 : vector<32x1xf32>
    %7 = arith.mulf %2, %2 : vector<32x128xf32>
    %cst_5 = arith.constant dense<0.000000e+00> : vector<32xf32>
    %8 = vector.multi_reduction <add>, %7, %cst_5 [1] : vector<32x128xf32> to vector<32xf32>
    %9 = vector.shape_cast %8 : vector<32xf32> to vector<32x1xf32>
    %cst_6 = arith.constant 7.812500e-03 : f32
    %10 = vector.broadcast %cst_6 : f32 to vector<32x1xf32>
    %11 = arith.mulf %9, %10 : vector<32x1xf32>
    %12 = arith.mulf %6, %6 : vector<32x1xf32>
    %13 = arith.subf %11, %12 : vector<32x1xf32>
    %14 = vector.broadcast %6 : vector<32x1xf32> to vector<32x128xf32>
    %15 = arith.subf %2, %14 : vector<32x128xf32>
    %cst_7 = arith.constant 9.99999974E-6 : f32
    %16 = vector.broadcast %cst_7 : f32 to vector<32x1xf32>
    %17 = arith.addf %13, %16 : vector<32x1xf32>
    %18 = math.rsqrt %17 : vector<32x1xf32>
    %19 = vector.broadcast %18 : vector<32x1xf32> to vector<32x128xf32>
    %20 = arith.mulf %15, %19 : vector<32x128xf32>
    %c0_8 = arith.constant 0 : index
    %c0_9 = arith.constant 0 : index
    %21 = vector.load %arg3[%c0_8, %c0_9] : memref<32x1xf32, #tpu.memory_space<vmem>>, vector<32x1xf32>
    %22 = vector.broadcast %21 : vector<32x1xf32> to vector<32x128xf32>
    %23 = arith.mulf %20, %22 : vector<32x128xf32>
    %c0_10 = arith.constant 0 : index
    %c0_11 = arith.constant 0 : index
    %24 = vector.load %arg4[%c0_10, %c0_11] : memref<32x1xf32, #tpu.memory_space<vmem>>, vector<32x1xf32>
    %25 = vector.broadcast %24 : vector<32x1xf32> to vector<32x128xf32>
    %26 = arith.addf %23, %25 : vector<32x128xf32>
    %cst_12 = arith.constant 0.000000e+00 : f32
    %27 = vector.broadcast %cst_12 : f32 to vector<32x128xf32>
    %28 = arith.maximumf %26, %27 : vector<32x128xf32>
    %29 = tpu.iota {dimensions = array<i32: 1>} : vector<1x128xi32>
    %c64_i32 = arith.constant 64 : i32
    %c0_i32 = arith.constant 0 : i32
    %30 = arith.cmpi eq, %c64_i32, %c0_i32 : i32
    %c1_i32 = arith.constant 1 : i32
    %31 = arith.select %30, %c1_i32, %c64_i32 : i32
    %32 = vector.broadcast %31 : i32 to vector<1x128xi32>
    %33 = arith.remsi %29, %32 : vector<1x128xi32>
    %c0_i32_13 = arith.constant 0 : i32
    %34 = vector.broadcast %c0_i32_13 : i32 to vector<1x128xi32>
    %35 = arith.cmpi ne, %33, %34 : vector<1x128xi32>
    %c0_i32_14 = arith.constant 0 : i32
    %36 = vector.broadcast %c0_i32_14 : i32 to vector<1x128xi32>
    %37 = arith.cmpi slt, %33, %36 : vector<1x128xi32>
    %c0_i32_15 = arith.constant 0 : i32
    %38 = arith.cmpi slt, %31, %c0_i32_15 : i32
    %39 = vector.broadcast %38 : i1 to vector<1x128xi1>
    %40 = vector.broadcast %39 : vector<1x128xi1> to vector<1x128xi1>
    %41 = arith.xori %37, %40 : vector<1x128xi1>
    %42 = arith.andi %41, %35 : vector<1x128xi1>
    %43 = vector.broadcast %31 : i32 to vector<1x128xi32>
    %44 = arith.addi %33, %43 : vector<1x128xi32>
    %45 = arith.select %42, %44, %33 : vector<1x128xi1>, vector<1x128xi32>
    %cst_16 = arith.constant 0.000000e+00 : f32
    %46 = vector.broadcast %cst_16 : f32 to vector<32x1xf32>
    %47 = vector.extract_strided_slice %28 {offsets = [0, 0], sizes = [32, 127], strides = [1, 1]} : vector<32x128xf32> to vector<32x127xf32>
    %48 = tpu.concatenate %46, %47 in 1 : vector<32x1xf32>, vector<32x127xf32> -> vector<32x128xf32>
    %c-1_i32 = arith.constant -1 : i32
    %49 = vector.broadcast %c-1_i32 : i32 to vector<1x128xi32>
    %50 = arith.addi %45, %49 : vector<1x128xi32>
    %c0_i32_17 = arith.constant 0 : i32
    %51 = vector.broadcast %c0_i32_17 : i32 to vector<1x128xi32>
    %52 = arith.cmpi sge, %50, %51 : vector<1x128xi32>
    %c-1_i32_18 = arith.constant -1 : i32
    %53 = vector.broadcast %c-1_i32_18 : i32 to vector<1x128xi32>
    %54 = arith.addi %45, %53 : vector<1x128xi32>
    %c64_i32_19 = arith.constant 64 : i32
    %55 = vector.broadcast %c64_i32_19 : i32 to vector<1x128xi32>
    %56 = arith.cmpi slt, %54, %55 : vector<1x128xi32>
    %57 = arith.andi %52, %56 : vector<1x128xi1>
    %cst_20 = arith.constant 0.000000e+00 : f32
    %58 = vector.shape_cast %57 : vector<1x128xi1> to vector<1x128xi1>
    %59 = vector.broadcast %58 : vector<1x128xi1> to vector<32x128xi1>
    %60 = vector.broadcast %cst_20 : f32 to vector<32x128xf32>
    %61 = arith.select %59, %48, %60 : vector<32x128xi1>, vector<32x128xf32>
    %c0_21 = arith.constant 0 : index
    %c0_22 = arith.constant 0 : index
    %62 = vector.load %arg9[%c0_21, %c0_22] : memref<96x128xf32, #tpu.memory_space<vmem>>, vector<32x128xf32>
    tpu.vector_store %arg9[%c0_21, %c0_22], %61 {strides = array<i32>} : memref<96x128xf32, #tpu.memory_space<vmem>>, vector<32x128xf32>,
    %c32 = arith.constant 32 : index
    %c0_23 = arith.constant 0 : index
    %63 = vector.load %arg9[%c32, %c0_23] : memref<96x128xf32, #tpu.memory_space<vmem>>, vector<32x128xf32>
    tpu.vector_store %arg9[%c32, %c0_23], %28 {strides = array<i32>} : memref<96x128xf32, #tpu.memory_space<vmem>>, vector<32x128xf32>,
    %64 = vector.extract_strided_slice %28 {offsets = [0, 1], sizes = [32, 127], strides = [1, 1]} : vector<32x128xf32> to vector<32x127xf32>
    %cst_24 = arith.constant 0.000000e+00 : f32
    %65 = vector.broadcast %cst_24 : f32 to vector<32x1xf32>
    %66 = tpu.concatenate %64, %65 in 1 : vector<32x127xf32>, vector<32x1xf32> -> vector<32x128xf32>
    %c1_i32_25 = arith.constant 1 : i32
    %67 = vector.broadcast %c1_i32_25 : i32 to vector<1x128xi32>
    %68 = arith.addi %45, %67 : vector<1x128xi32>
    %c0_i32_26 = arith.constant 0 : i32
    %69 = vector.broadcast %c0_i32_26 : i32 to vector<1x128xi32>
    %70 = arith.cmpi sge, %68, %69 : vector<1x128xi32>
    %c1_i32_27 = arith.constant 1 : i32
    %71 = vector.broadcast %c1_i32_27 : i32 to vector<1x128xi32>
    %72 = arith.addi %45, %71 : vector<1x128xi32>
    %c64_i32_28 = arith.constant 64 : i32
    %73 = vector.broadcast %c64_i32_28 : i32 to vector<1x128xi32>
    %74 = arith.cmpi slt, %72, %73 : vector<1x128xi32>
    %75 = arith.andi %70, %74 : vector<1x128xi1>
    %cst_29 = arith.constant 0.000000e+00 : f32
    %76 = vector.shape_cast %75 : vector<1x128xi1> to vector<1x128xi1>
    %77 = vector.broadcast %76 : vector<1x128xi1> to vector<32x128xi1>
    %78 = vector.broadcast %cst_29 : f32 to vector<32x128xf32>
    %79 = arith.select %77, %66, %78 : vector<32x128xi1>, vector<32x128xf32>
    %c64 = arith.constant 64 : index
    %c0_30 = arith.constant 0 : index
    %80 = vector.load %arg9[%c64, %c0_30] : memref<96x128xf32, #tpu.memory_space<vmem>>, vector<32x128xf32>
    tpu.vector_store %arg9[%c64, %c0_30], %79 {strides = array<i32>} : memref<96x128xf32, #tpu.memory_space<vmem>>, vector<32x128xf32>,
    %c0_31 = arith.constant 0 : index
    %c0_32 = arith.constant 0 : index
    %81 = vector.load %arg5[%c0_31, %c0_32] : memref<32x96xf32, #tpu.memory_space<vmem>>, vector<32x96xf32>
    %c0_33 = arith.constant 0 : index
    %c0_34 = arith.constant 0 : index
    %82 = vector.load %arg9[%c0_33, %c0_34] : memref<96x128xf32, #tpu.memory_space<vmem>>, vector<96x128xf32>
    %cst_35 = arith.constant dense<0.000000e+00> : vector<32x128xf32>
    %83 = tpu.matmul %81, %82, %cst_35 {dimension_numbers = #tpu.dot_dimension_numbers<[1], [0], [0], [1], [0, 0, 1, 1], [], []>} : vector<32x96xf32>, vector<96x128xf32>, vector<32x128xf32> -> vector<32x128xf32>
    %cst_36 = arith.constant dense<0.000000e+00> : vector<32xf32>
    %84 = vector.multi_reduction <add>, %83, %cst_36 [1] : vector<32x128xf32> to vector<32xf32>
    %85 = vector.shape_cast %84 : vector<32xf32> to vector<32x1xf32>
    %cst_37 = arith.constant 7.812500e-03 : f32
    %86 = vector.broadcast %cst_37 : f32 to vector<32x1xf32>
    %87 = arith.mulf %85, %86 : vector<32x1xf32>
    %88 = arith.mulf %83, %83 : vector<32x128xf32>
    %cst_38 = arith.constant dense<0.000000e+00> : vector<32xf32>
    %89 = vector.multi_reduction <add>, %88, %cst_38 [1] : vector<32x128xf32> to vector<32xf32>
    %90 = vector.shape_cast %89 : vector<32xf32> to vector<32x1xf32>
    %cst_39 = arith.constant 7.812500e-03 : f32
    %91 = vector.broadcast %cst_39 : f32 to vector<32x1xf32>
    %92 = arith.mulf %90, %91 : vector<32x1xf32>
    %93 = arith.mulf %87, %87 : vector<32x1xf32>
    %94 = arith.subf %92, %93 : vector<32x1xf32>
    %95 = vector.broadcast %87 : vector<32x1xf32> to vector<32x128xf32>
    %96 = arith.subf %83, %95 : vector<32x128xf32>
    %cst_40 = arith.constant 9.99999974E-6 : f32
    %97 = vector.broadcast %cst_40 : f32 to vector<32x1xf32>
    %98 = arith.addf %94, %97 : vector<32x1xf32>
    %99 = math.rsqrt %98 : vector<32x1xf32>
    %100 = vector.broadcast %99 : vector<32x1xf32> to vector<32x128xf32>
    %101 = arith.mulf %96, %100 : vector<32x128xf32>
    %c0_41 = arith.constant 0 : index
    %c0_42 = arith.constant 0 : index
    %102 = vector.load %arg6[%c0_41, %c0_42] : memref<32x1xf32, #tpu.memory_space<vmem>>, vector<32x1xf32>
    %103 = vector.broadcast %102 : vector<32x1xf32> to vector<32x128xf32>
    %104 = arith.mulf %101, %103 : vector<32x128xf32>
    %c0_43 = arith.constant 0 : index
    %c0_44 = arith.constant 0 : index
    %105 = vector.load %arg7[%c0_43, %c0_44] : memref<32x1xf32, #tpu.memory_space<vmem>>, vector<32x1xf32>
    %106 = vector.broadcast %105 : vector<32x1xf32> to vector<32x128xf32>
    %107 = arith.addf %104, %106 : vector<32x128xf32>
    %c0_45 = arith.constant 0 : index
    %c0_46 = arith.constant 0 : index
    %108 = vector.load %arg1[%c0_45, %c0_46] : memref<32x128xf32, #tpu.memory_space<vmem>>, vector<32x128xf32>
    %109 = arith.addf %108, %107 : vector<32x128xf32>
    %cst_47 = arith.constant 0.000000e+00 : f32
    %110 = vector.broadcast %cst_47 : f32 to vector<32x128xf32>
    %111 = arith.maximumf %109, %110 : vector<32x128xf32>
    %c0_48 = arith.constant 0 : index
    %c0_49 = arith.constant 0 : index
    %112 = vector.load %arg8[%c0_48, %c0_49] : memref<32x128xf32, #tpu.memory_space<vmem>>, vector<32x128xf32>
    tpu.vector_store %arg8[%c0_48, %c0_49], %111 {strides = array<i32>} : memref<32x128xf32, #tpu.memory_space<vmem>>, vector<32x128xf32>,
    return
  }
}

</mosaic_0001>

<llo_original>
// kernel: resblock_forward.1
$region0: #{resblock_forward.1}
  #allocation0 [shape = 'u32[]', space=smem, size = 0x4, offset = 0x4, fixed_abs, tag = 'smem constant byte address 0x4 - core index']
  #allocation1 [shape = 'u32[144,128]{1,0:T(1,128)}', space=vmem, size = 0x12000, scoped, tag = 'internal scratch']
  #allocation2 [shape = 'f32[96,128]{1,0:T(8,128)}', space=vmem, size = 0xc000, scoped, tag = 'scratch operand']
  %s0 = inlined_call_operand.vmem [shape: f32[96,128], index: 0, kind: input, shape index: {}]
  %s1 = inlined_call_operand.vmem [shape: f32[32,128], index: 1, kind: input, shape index: {}]
  %s2 = inlined_call_operand.vmem [shape: f32[32,96], index: 2, kind: input, shape index: {}]
  %s3 = inlined_call_operand.vmem [shape: f32[32,1], index: 3, kind: input, shape index: {}]
  %s4 = inlined_call_operand.vmem [shape: f32[32,1], index: 4, kind: input, shape index: {}]
  %s5 = inlined_call_operand.vmem [shape: f32[32,96], index: 5, kind: input, shape index: {}]
  %s6 = inlined_call_operand.vmem [shape: f32[32,1], index: 6, kind: input, shape index: {}]
  %s7 = inlined_call_operand.vmem [shape: f32[32,1], index: 7, kind: input, shape index: {}]
  %s8 = inlined_call_operand.vmem [shape: f32[32,128], index: 8, kind: output, shape index: {}]
  %s9 = sld [smem:[#allocation0]]
  $region42: #{resblock_forward.1} parent=0
    _
  %s11 = ssub.s32 1, %s9
  %s12 = scalar_select 0, %s11, %s9
  // Predicated region
  $region2: #{resblock_forward.1} parent=0 // pred_check
    _
  $region3: #{resblock_forward.1} parent=0 // pred_check_branch
    %14 = sbr.rel (0) target = $region5
  $region4: #{resblock_forward.1} parent=0 // pred_region
    _
  $region5: #{resblock_forward.1} parent=0 // pred_fallthru
    _
  // Predicated region
  $region6: #{resblock_forward.1} parent=0 // pred_check
    _
  $region7: #{resblock_forward.1} parent=0 // pred_check_branch
    %16 = sbr.rel (0) target = $region9
  $region8: #{resblock_forward.1} parent=0 // pred_region
    _
  $region9: #{resblock_forward.1} parent=0 // pred_fallthru
    _
  // Predicated region
  $region10: #{resblock_forward.1} parent=0 // pred_check
    _
  $region11: #{resblock_forward.1} parent=0 // pred_check_branch
    %18 = sbr.rel (0) target = $region13
  $region12: #{resblock_forward.1} parent=0 // pred_region
    _
  $region13: #{resblock_forward.1} parent=0 // pred_fallthru
    _
  // Predicated region
  $region14: #{resblock_forward.1} parent=0 // pred_check
    _
  $region15: #{resblock_forward.1} parent=0 // pred_check_branch
    %20 = sbr.rel (0) target = $region17
  $region16: #{resblock_forward.1} parent=0 // pred_region
    _
  $region17: #{resblock_forward.1} parent=0 // pred_fallthru
    _
  // Predicated region
  $region18: #{resblock_forward.1} parent=0 // pred_check
    _
  $region19: #{resblock_forward.1} parent=0 // pred_check_branch
    %22 = sbr.rel (0) target = $region21
  $region20: #{resblock_forward.1} parent=0 // pred_region
    _
  $region21: #{resblock_forward.1} parent=0 // pred_fallthru
    _
  // Predicated region
  $region22: #{resblock_forward.1} parent=0 // pred_check
    _
  $region23: #{resblock_forward.1} parent=0 // pred_check_branch
    %24 = sbr.rel (0) target = $region25
  $region24: #{resblock_forward.1} parent=0 // pred_region
    _
  $region25: #{resblock_forward.1} parent=0 // pred_fallthru
    _
  // Predicated region
  $region26: #{resblock_forward.1} parent=0 // pred_check
    _
  $region27: #{resblock_forward.1} parent=0 // pred_check_branch
    %26 = sbr.rel (0) target = $region29
  $region28: #{resblock_forward.1} parent=0 // pred_region
    _
  $region29: #{resblock_forward.1} parent=0 // pred_fallthru
    _
  // Predicated region
  $region30: #{resblock_forward.1} parent=0 // pred_check
    _
  $region31: #{resblock_forward.1} parent=0 // pred_check_branch
    %28 = sbr.rel (0) target = $region33
  $region32: #{resblock_forward.1} parent=0 // pred_region
    _
  $region33: #{resblock_forward.1} parent=0 // pred_fallthru
    _
  %v29 = vld [vmem:[%s2] sm:$0xff]
  %v30 = vld [vmem:[%s2 + $0x8] sm:$0xff]
  %v31 = vld [vmem:[%s2 + $0x10] sm:$0xff]
  %v32 = vld [vmem:[%s2 + $0x18] sm:$0xff]
  %v33 = vld [vmem:[%s0] sm:$0xff]
  %v34 = vld [vmem:[%s0 + $0x8] sm:$0xff]
  %v35 = vld [vmem:[%s0 + $0x10] sm:$0xff]
  %v36 = vld [vmem:[%s0 + $0x18] sm:$0xff]
  %v37 = vld [vmem:[%s0 + $0x20] sm:$0xff]
  %v38 = vld [vmem:[%s0 + $0x28] sm:$0xff]
  %v39 = vld [vmem:[%s0 + $0x30] sm:$0xff]
  %v40 = vld [vmem:[%s0 + $0x38] sm:$0xff]
  %v41 = vld [vmem:[%s0 + $0x40] sm:$0xff]
  %v42 = vld [vmem:[%s0 + $0x48] sm:$0xff]
  %v43 = vld [vmem:[%s0 + $0x50] sm:$0xff]
  %v44 = vld [vmem:[%s0 + $0x58] sm:$0xff]
  %vm45 = vcmask 785408
  %v47 = vsel %vm45, %v29, 0
  %v50 = vsel %vm45, %v30, 0
  %v53 = vsel %vm45, %v31, 0
  %v56 = vsel %vm45, %v32, 0
  %58 = vmatprep.subr.mxu0 0.0
  %59 = vmatpush1.msra.mxu0 0.0
  %60 = vmatprep.subr.mxu0 0.0
  %61 = vmatpush1.msra.mxu0 0.0
  %62 = vmatprep.subr.mxu0 0.0
  %63 = vmatpush1.msra.mxu0 0.0
  %64 = vmatprep.subr.mxu0 0.0
  %65 = vmatpush1.msra.mxu0 0.0
  %66 = vmatprep.subr.mxu0 0.0
  %67 = vmatpush1.msra.mxu0 %v44
  %68 = vmatprep.subr.mxu0 0.0
  %69 = vmatpush1.msra.mxu0 %v43
  %70 = vmatprep.subr.mxu0 0.0
  %71 = vmatpush1.msra.mxu0 %v42
  %72 = vmatprep.subr.mxu0 0.0
  %73 = vmatpush1.msra.mxu0 %v41
  %74 = vmatprep.subr.mxu0 0.0
  %75 = vmatpush1.msra.mxu0 %v40
  %76 = vmatprep.subr.mxu0 0.0
  %77 = vmatpush1.msra.mxu0 %v39
  %78 = vmatprep.subr.mxu0 0.0
  %79 = vmatpush1.msra.mxu0 %v38
  %80 = vmatprep.subr.mxu0 0.0
  %81 = vmatpush1.msra.mxu0 %v37
  %82 = vmatprep.subr.mxu0 0.0
  %83 = vmatpush1.msra.mxu0 %v36
  %84 = vmatprep.subr.mxu0 0.0
  %85 = vmatpush1.msra.mxu0 %v35
  %86 = vmatprep.subr.mxu0 0.0
  %87 = vmatpush1.msra.mxu0 %v34
  %88 = vmatprep.subr.mxu0 0.0
  %89 = vmatpush1.msra.mxu0 %v33
  %90 = vmatprep.subr.mxu0 0.0
  %91 = vmatpush2.msra.mxu0 0.0
  %92 = vmatprep.subr.mxu0 0.0
  %93 = vmatpush2.msra.mxu0 0.0
  %94 = vmatprep.subr.mxu0 0.0
  %95 = vmatpush2.msra.mxu0 0.0
  %96 = vmatprep.subr.mxu0 0.0
  %97 = vmatpush2.msra.mxu0 0.0
  %98 = vmatprep.subr.mxu0 0.0
  %99 = vmatpush2.msra.mxu0 0.0
  %100 = vmatprep.subr.mxu0 0.0
  %101 = vmatpush2.msra.mxu0 0.0
  %102 = vmatprep.subr.mxu0 0.0
  %103 = vmatpush2.msra.mxu0 0.0
  %104 = vmatprep.subr.mxu0 0.0
  %105 = vmatpush2.msra.mxu0 0.0
  %106 = vmatprep.subr.mxu0 0.0
  %107 = vmatpush2.msra.mxu0 0.0
  %108 = vmatprep.subr.mxu0 0.0
  %109 = vmatpush2.msra.mxu0 0.0
  %110 = vmatprep.subr.mxu0 0.0
  %111 = vmatpush2.msra.mxu0 0.0
  %112 = vmatprep.subr.mxu0 0.0
  %113 = vmatpush2.msra.mxu0 0.0
  %114 = vmatprep.subr.mxu0 0.0
  %115 = vmatpush2.msra.mxu0 0.0
  %116 = vmatprep.subr.mxu0 0.0
  %117 = vmatpush2.msra.mxu0 0.0
  %118 = vmatprep.subr.mxu0 0.0
  %119 = vmatpush2.msra.mxu0 0.0
  %120 = vmatprep.subr.mxu0 0.0
  %121 = vmatpush2.msra.mxu0 0.0
  %122 = vmatprep.mubr.f32.mxu0 0.0
  %123 = vmatmul.mubr.f32.gmra.mxu0 %v47
  %v124 = vpop.f32.mrf.mxu0
  %v125 = vadd.f32 0.0, %v124
  %v126 = vpop.f32.mrf.mxu0
  %127 = vmatprep.mubr.f32.mxu0 0.0
  %128 = vmatmul.mubr.f32.gmra.mxu0 %v50
  %v129 = vpop.f32.mrf.mxu0
  %v130 = vadd.f32 0.0, %v129
  %v131 = vpop.f32.mrf.mxu0
  %132 = vmatprep.mubr.f32.mxu0 0.0
  %133 = vmatmul.mubr.f32.gmra.mxu0 %v53
  %v134 = vpop.f32.mrf.mxu0
  %v135 = vadd.f32 0.0, %v134
  %v136 = vpop.f32.mrf.mxu0
  %137 = vmatprep.mubr.f32.mxu0 0.0
  %138 = vmatmul.mubr.f32.gmra.mxu0 %v56
  %v139 = vpop.f32.mrf.mxu0
  %v140 = vadd.f32 0.0, %v139
  %v141 = vpop.f32.mrf.mxu0
  %142 = vdwg.mxu0
  %143 = vadd.xlane.f32.xlu0 %v125
  %v144 = vpop.xlane.xlu0 %143
  %145 = vadd.xlane.f32.xlu0 %v130
  %v146 = vpop.xlane.xlu0 %145
  %147 = vadd.xlane.f32.xlu0 %v135
  %v148 = vpop.xlane.xlu0 %147
  %149 = vadd.xlane.f32.xlu0 %v140
  %v150 = vpop.xlane.xlu0 %149
  %v151 = vmul.f32 %v144, 0.0078125
  %v152 = vmul.f32 %v146, 0.0078125
  %v153 = vmul.f32 %v148, 0.0078125
  %v154 = vmul.f32 %v150, 0.0078125
  %v155 = vmul.f32 %v125, %v125
  %v156 = vmul.f32 %v130, %v130
  %v157 = vmul.f32 %v135, %v135
  %v158 = vmul.f32 %v140, %v140
  %159 = vadd.xlane.f32.xlu0 %v155
  %v160 = vpop.xlane.xlu0 %159
  %161 = vadd.xlane.f32.xlu0 %v156
  %v162 = vpop.xlane.xlu0 %161
  %163 = vadd.xlane.f32.xlu0 %v157
  %v164 = vpop.xlane.xlu0 %163
  %165 = vadd.xlane.f32.xlu0 %v158
  %v166 = vpop.xlane.xlu0 %165
  %v167 = vmul.f32 %v160, 0.0078125
  %v168 = vmul.f32 %v162, 0.0078125
  %v169 = vmul.f32 %v164, 0.0078125
  %v170 = vmul.f32 %v166, 0.0078125
  %v171 = vmul.f32 %v151, %v151
  %v172 = vmul.f32 %v152, %v152
  %v173 = vmul.f32 %v153, %v153
  %v174 = vmul.f32 %v154, %v154
  %v175 = vsub.f32 %v167, %v171
  %v176 = vsub.f32 %v168, %v172
  %v177 = vsub.f32 %v169, %v173
  %v178 = vsub.f32 %v170, %v174
  %v179 = vsub.f32 %v125, %v151
  %v180 = vsub.f32 %v130, %v152
  %v181 = vsub.f32 %v135, %v153
  %v182 = vsub.f32 %v140, %v154
  %v183 = vadd.f32 %v175, 1e-05
  %v184 = vadd.f32 %v176, 1e-05
  %v185 = vadd.f32 %v177, 1e-05
  %v186 = vadd.f32 %v178, 1e-05
  %v187 = vrsqrt.pop %v183
  %v188 = vrsqrt.pop %v184
  %v189 = vrsqrt.pop %v185
  %v190 = vrsqrt.pop %v186
  %v191 = vmul.f32 %v179, %v187
  %v192 = vmul.f32 %v180, %v188
  %v193 = vmul.f32 %v181, %v189
  %v194 = vmul.f32 %v182, %v190
  %v195 = vld [vmem:[%s3] sm:$0xff]
  %v196 = vld [vmem:[%s3 + $0x8] sm:$0xff]
  %v197 = vld [vmem:[%s3 + $0x10] sm:$0xff]
  %v198 = vld [vmem:[%s3 + $0x18] sm:$0xff]
  %200 = vset.pattern.permute.xlu0 0
  %201 = vperm.xlu0 %200, %v195
  %v202 = vpop.permute.xlu0 %201
  %205 = vset.pattern.permute.xlu0 0
  %206 = vperm.xlu0 %205, %v196
  %v207 = vpop.permute.xlu0 %206
  %210 = vset.pattern.permute.xlu0 0
  %211 = vperm.xlu0 %210, %v197
  %v212 = vpop.permute.xlu0 %211
  %215 = vset.pattern.permute.xlu0 0
  %216 = vperm.xlu0 %215, %v198
  %v217 = vpop.permute.xlu0 %216
  %v219 = vmul.f32 %v191, %v202
  %v220 = vmul.f32 %v192, %v207
  %v221 = vmul.f32 %v193, %v212
  %v222 = vmul.f32 %v194, %v217
  %v223 = vld [vmem:[%s4] sm:$0xff]
  %v224 = vld [vmem:[%s4 + $0x8] sm:$0xff]
  %v225 = vld [vmem:[%s4 + $0x10] sm:$0xff]
  %v226 = vld [vmem:[%s4 + $0x18] sm:$0xff]
  %228 = vset.pattern.permute.xlu0 0
  %229 = vperm.xlu0 %228, %v223
  %v230 = vpop.permute.xlu0 %229
  %233 = vset.pattern.permute.xlu0 0
  %234 = vperm.xlu0 %233, %v224
  %v235 = vpop.permute.xlu0 %234
  %238 = vset.pattern.permute.xlu0 0
  %239 = vperm.xlu0 %238, %v225
  %v240 = vpop.permute.xlu0 %239
  %243 = vset.pattern.permute.xlu0 0
  %244 = vperm.xlu0 %243, %v226
  %v245 = vpop.permute.xlu0 %244
  %v247 = vadd.f32 %v219, %v230
  %v248 = vadd.f32 %v220, %v235
  %v249 = vadd.f32 %v221, %v240
  %v250 = vadd.f32 %v222, %v245
  %v251 = vmax.f32 %v247, 0.0
  %v252 = vmax.f32 %v248, 0.0
  %v253 = vmax.f32 %v249, 0.0
  %v254 = vmax.f32 %v250, 0.0
  %v255 = vlaneseq
  %v256 = vand.u32 %v255, 127
  %vm257 = vcmp.lt.s32.totalorder %v256, 0
  %v258 = vsub.s32 0, %v256
  %v259 = vsel %vm257, %v258, %v256
  %v260 = vshrl.u32 %v259, 6
  %v261 = vand.u32 %v259, 63
  %v262 = vsub.s32 0, %v261
  %v263 = vsel %vm257, %v262, %v261
  %vm264 = vcmp.ne.s32.totalorder %v263, 0
  %vm265 = vcmp.lt.s32.totalorder %v263, 0
  %vm266 = vmand %vm265, %vm264
  %v267 = vadd.s32 %v263, 64
  %v268 = vsel %vm266, %v267, %v263
  %273 = vrot.lane.b32.xlu0 %v251, 1
  %v274 = vpop.permute.xlu0 %273
  %275 = vrot.lane.b32.xlu0 %v252, 1
  %v276 = vpop.permute.xlu0 %275
  %277 = vrot.lane.b32.xlu0 %v253, 1
  %v278 = vpop.permute.xlu0 %277
  %279 = vrot.lane.b32.xlu0 %v254, 1
  %v280 = vpop.permute.xlu0 %279
  %vm285 = vcmask 7168
  %v286 = vsel %vm285, 0.0, %v274
  %v287 = vsel %vm285, 0.0, %v276
  %v288 = vsel %vm285, 0.0, %v278
  %v289 = vsel %vm285, 0.0, %v280
  %v290 = vadd.s32 %v268, 4294967295
  %vm291 = vcmp.ge.s32.totalorder %v290, 0
  %vm292 = vcmp.lt.s32.totalorder %v290, 64
  %vm293 = vmand %vm291, %vm292
  %v294 = vsel %vm293, 1, 0
  %vm295 = vcmp.eq.s32.totalorder %v294, 1
  %v296 = vsel %vm295, %v286, 0.0
  %v297 = vsel %vm295, %v287, 0.0
  %v298 = vsel %vm295, %v288, 0.0
  %v299 = vsel %vm295, %v289, 0.0
  %300 = vst [vmem:[#allocation2] sm:$0xff] %v296
  %301 = vst [vmem:[#allocation2 + $0x8] sm:$0xff] %v297
  %302 = vst [vmem:[#allocation2 + $0x10] sm:$0xff] %v298
  %303 = vst [vmem:[#allocation2 + $0x18] sm:$0xff] %v299
  %304 = vst [vmem:[#allocation2 + $0x20] sm:$0xff] %v251
  %305 = vst [vmem:[#allocation2 + $0x28] sm:$0xff] %v252
  %306 = vst [vmem:[#allocation2 + $0x30] sm:$0xff] %v253
  %307 = vst [vmem:[#allocation2 + $0x38] sm:$0xff] %v254
  %308 = vrot.lane.b32.xlu0 %v251, 127
  %v309 = vpop.permute.xlu0 %308
  %310 = vrot.lane.b32.xlu0 %v252, 127
  %v311 = vpop.permute.xlu0 %310
  %312 = vrot.lane.b32.xlu0 %v253, 127
  %v313 = vpop.permute.xlu0 %312
  %314 = vrot.lane.b32.xlu0 %v254, 127
  %v315 = vpop.permute.xlu0 %314
  %vm320 = vcmask 1039360
  %v321 = vsel %vm320, %v309, 0.0
  %v322 = vsel %vm320, %v311, 0.0
  %v323 = vsel %vm320, %v313, 0.0
  %v324 = vsel %vm320, %v315, 0.0
  %v325 = vadd.s32 %v268, 1
  %vm326 = vcmp.ge.s32.totalorder %v325, 0
  %vm327 = vcmp.lt.s32.totalorder %v325, 64
  %vm328 = vmand %vm326, %vm327
  %v329 = vsel %vm328, 1, 0
  %vm330 = vcmp.eq.s32.totalorder %v329, 1
  %v331 = vsel %vm330, %v321, 0.0
  %v332 = vsel %vm330, %v322, 0.0
  %v333 = vsel %vm330, %v323, 0.0
  %v334 = vsel %vm330, %v324, 0.0
  %335 = vst [vmem:[#allocation2 + $0x40] sm:$0xff] %v331
  %336 = vst [vmem:[#allocation2 + $0x48] sm:$0xff] %v332
  %337 = vst [vmem:[#allocation2 + $0x50] sm:$0xff] %v333
  %338 = vst [vmem:[#allocation2 + $0x58] sm:$0xff] %v334
  %v339 = vld [vmem:[%s5] sm:$0xff]
  %v340 = vld [vmem:[%s5 + $0x8] sm:$0xff]
  %v341 = vld [vmem:[%s5 + $0x10] sm:$0xff]
  %v342 = vld [vmem:[%s5 + $0x18] sm:$0xff]
  %v343 = vld [vmem:[#allocation2] sm:$0xff]
  %v344 = vld [vmem:[#allocation2 + $0x8] sm:$0xff]
  %v345 = vld [vmem:[#allocation2 + $0x10] sm:$0xff]
  %v346 = vld [vmem:[#allocation2 + $0x18] sm:$0xff]
  %v347 = vld [vmem:[#allocation2 + $0x20] sm:$0xff]
  %v348 = vld [vmem:[#allocation2 + $0x28] sm:$0xff]
  %v349 = vld [vmem:[#allocation2 + $0x30] sm:$0xff]
  %v350 = vld [vmem:[#allocation2 + $0x38] sm:$0xff]
  %v351 = vld [vmem:[#allocation2 + $0x40] sm:$0xff]
  %v352 = vld [vmem:[#allocation2 + $0x48] sm:$0xff]
  %v353 = vld [vmem:[#allocation2 + $0x50] sm:$0xff]
  %v354 = vld [vmem:[#allocation2 + $0x58] sm:$0xff]
  %v356 = vsel %vm45, %v339, 0
  %v359 = vsel %vm45, %v340, 0
  %v362 = vsel %vm45, %v341, 0
  %v365 = vsel %vm45, %v342, 0
  %367 = vmatprep.subr.mxu0 0.0
  %368 = vmatpush1.msra.mxu0 0.0
  %369 = vmatprep.subr.mxu0 0.0
  %370 = vmatpush1.msra.mxu0 0.0
  %371 = vmatprep.subr.mxu0 0.0
  %372 = vmatpush1.msra.mxu0 0.0
  %373 = vmatprep.subr.mxu0 0.0
  %374 = vmatpush1.msra.mxu0 0.0
  %375 = vmatprep.subr.mxu0 0.0
  %376 = vmatpush1.msra.mxu0 %v354
  %377 = vmatprep.subr.mxu0 0.0
  %378 = vmatpush1.msra.mxu0 %v353
  %379 = vmatprep.subr.mxu0 0.0
  %380 = vmatpush1.msra.mxu0 %v352
  %381 = vmatprep.subr.mxu0 0.0
  %382 = vmatpush1.msra.mxu0 %v351
  %383 = vmatprep.subr.mxu0 0.0
  %384 = vmatpush1.msra.mxu0 %v350
  %385 = vmatprep.subr.mxu0 0.0
  %386 = vmatpush1.msra.mxu0 %v349
  %387 = vmatprep.subr.mxu0 0.0
  %388 = vmatpush1.msra.mxu0 %v348
  %389 = vmatprep.subr.mxu0 0.0
  %390 = vmatpush1.msra.mxu0 %v347
  %391 = vmatprep.subr.mxu0 0.0
  %392 = vmatpush1.msra.mxu0 %v346
  %393 = vmatprep.subr.mxu0 0.0
  %394 = vmatpush1.msra.mxu0 %v345
  %395 = vmatprep.subr.mxu0 0.0
  %396 = vmatpush1.msra.mxu0 %v344
  %397 = vmatprep.subr.mxu0 0.0
  %398 = vmatpush1.msra.mxu0 %v343
  %399 = vmatprep.subr.mxu0 0.0
  %400 = vmatpush2.msra.mxu0 0.0
  %401 = vmatprep.subr.mxu0 0.0
  %402 = vmatpush2.msra.mxu0 0.0
  %403 = vmatprep.subr.mxu0 0.0
  %404 = vmatpush2.msra.mxu0 0.0
  %405 = vmatprep.subr.mxu0 0.0
  %406 = vmatpush2.msra.mxu0 0.0
  %407 = vmatprep.subr.mxu0 0.0
  %408 = vmatpush2.msra.mxu0 0.0
  %409 = vmatprep.subr.mxu0 0.0
  %410 = vmatpush2.msra.mxu0 0.0
  %411 = vmatprep.subr.mxu0 0.0
  %412 = vmatpush2.msra.mxu0 0.0
  %413 = vmatprep.subr.mxu0 0.0
  %414 = vmatpush2.msra.mxu0 0.0
  %415 = vmatprep.subr.mxu0 0.0
  %416 = vmatpush2.msra.mxu0 0.0
  %417 = vmatprep.subr.mxu0 0.0
  %418 = vmatpush2.msra.mxu0 0.0
  %419 = vmatprep.subr.mxu0 0.0
  %420 = vmatpush2.msra.mxu0 0.0
  %421 = vmatprep.subr.mxu0 0.0
  %422 = vmatpush2.msra.mxu0 0.0
  %423 = vmatprep.subr.mxu0 0.0
  %424 = vmatpush2.msra.mxu0 0.0
  %425 = vmatprep.subr.mxu0 0.0
  %426 = vmatpush2.msra.mxu0 0.0
  %427 = vmatprep.subr.mxu0 0.0
  %428 = vmatpush2.msra.mxu0 0.0
  %429 = vmatprep.subr.mxu0 0.0
  %430 = vmatpush2.msra.mxu0 0.0
  %431 = vmatprep.mubr.f32.mxu0 0.0
  %432 = vmatmul.mubr.f32.gmra.mxu0 %v356
  %v433 = vpop.f32.mrf.mxu0
  %v434 = vadd.f32 0.0, %v433
  %v435 = vpop.f32.mrf.mxu0
  %436 = vmatprep.mubr.f32.mxu0 0.0
  %437 = vmatmul.mubr.f32.gmra.mxu0 %v359
  %v438 = vpop.f32.mrf.mxu0
  %v439 = vadd.f32 0.0, %v438
  %v440 = vpop.f32.mrf.mxu0
  %441 = vmatprep.mubr.f32.mxu0 0.0
  %442 = vmatmul.mubr.f32.gmra.mxu0 %v362
  %v443 = vpop.f32.mrf.mxu0
  %v444 = vadd.f32 0.0, %v443
  %v445 = vpop.f32.mrf.mxu0
  %446 = vmatprep.mubr.f32.mxu0 0.0
  %447 = vmatmul.mubr.f32.gmra.mxu0 %v365
  %v448 = vpop.f32.mrf.mxu0
  %v449 = vadd.f32 0.0, %v448
  %v450 = vpop.f32.mrf.mxu0
  %451 = vdwg.mxu0
  %452 = vadd.xlane.f32.xlu0 %v434
  %v453 = vpop.xlane.xlu0 %452
  %454 = vadd.xlane.f32.xlu0 %v439
  %v455 = vpop.xlane.xlu0 %454
  %456 = vadd.xlane.f32.xlu0 %v444
  %v457 = vpop.xlane.xlu0 %456
  %458 = vadd.xlane.f32.xlu0 %v449
  %v459 = vpop.xlane.xlu0 %458
  %v460 = vmul.f32 %v453, 0.0078125
  %v461 = vmul.f32 %v455, 0.0078125
  %v462 = vmul.f32 %v457, 0.0078125
  %v463 = vmul.f32 %v459, 0.0078125
  %v464 = vmul.f32 %v434, %v434
  %v465 = vmul.f32 %v439, %v439
  %v466 = vmul.f32 %v444, %v444
  %v467 = vmul.f32 %v449, %v449
  %468 = vadd.xlane.f32.xlu0 %v464
  %v469 = vpop.xlane.xlu0 %468
  %470 = vadd.xlane.f32.xlu0 %v465
  %v471 = vpop.xlane.xlu0 %470
  %472 = vadd.xlane.f32.xlu0 %v466
  %v473 = vpop.xlane.xlu0 %472
  %474 = vadd.xlane.f32.xlu0 %v467
  %v475 = vpop.xlane.xlu0 %474
  %v476 = vmul.f32 %v469, 0.0078125
  %v477 = vmul.f32 %v471, 0.0078125
  %v478 = vmul.f32 %v473, 0.0078125
  %v479 = vmul.f32 %v475, 0.0078125
  %v480 = vmul.f32 %v460, %v460
  %v481 = vmul.f32 %v461, %v461
  %v482 = vmul.f32 %v462, %v462
  %v483 = vmul.f32 %v463, %v463
  %v484 = vsub.f32 %v476, %v480
  %v485 = vsub.f32 %v477, %v481
  %v486 = vsub.f32 %v478, %v482
  %v487 = vsub.f32 %v479, %v483
  %v488 = vsub.f32 %v434, %v460
  %v489 = vsub.f32 %v439, %v461
  %v490 = vsub.f32 %v444, %v462
  %v491 = vsub.f32 %v449, %v463
  %v492 = vadd.f32 %v484, 1e-05
  %v493 = vadd.f32 %v485, 1e-05
  %v494 = vadd.f32 %v486, 1e-05
  %v495 = vadd.f32 %v487, 1e-05
  %v496 = vrsqrt.pop %v492
  %v497 = vrsqrt.pop %v493
  %v498 = vrsqrt.pop %v494
  %v499 = vrsqrt.pop %v495
  %v500 = vmul.f32 %v488, %v496
  %v501 = vmul.f32 %v489, %v497
  %v502 = vmul.f32 %v490, %v498
  %v503 = vmul.f32 %v491, %v499
  %v504 = vld [vmem:[%s6] sm:$0xff]
  %v505 = vld [vmem:[%s6 + $0x8] sm:$0xff]
  %v506 = vld [vmem:[%s6 + $0x10] sm:$0xff]
  %v507 = vld [vmem:[%s6 + $0x18] sm:$0xff]
  %509 = vset.pattern.permute.xlu0 0
  %510 = vperm.xlu0 %509, %v504
  %v511 = vpop.permute.xlu0 %510
  %514 = vset.pattern.permute.xlu0 0
  %515 = vperm.xlu0 %514, %v505
  %v516 = vpop.permute.xlu0 %515
  %519 = vset.pattern.permute.xlu0 0
  %520 = vperm.xlu0 %519, %v506
  %v521 = vpop.permute.xlu0 %520
  %524 = vset.pattern.permute.xlu0 0
  %525 = vperm.xlu0 %524, %v507
  %v526 = vpop.permute.xlu0 %525
  %v528 = vmul.f32 %v500, %v511
  %v529 = vmul.f32 %v501, %v516
  %v530 = vmul.f32 %v502, %v521
  %v531 = vmul.f32 %v503, %v526
  %v532 = vld [vmem:[%s7] sm:$0xff]
  %v533 = vld [vmem:[%s7 + $0x8] sm:$0xff]
  %v534 = vld [vmem:[%s7 + $0x10] sm:$0xff]
  %v535 = vld [vmem:[%s7 + $0x18] sm:$0xff]
  %537 = vset.pattern.permute.xlu0 0
  %538 = vperm.xlu0 %537, %v532
  %v539 = vpop.permute.xlu0 %538
  %542 = vset.pattern.permute.xlu0 0
  %543 = vperm.xlu0 %542, %v533
  %v544 = vpop.permute.xlu0 %543
  %547 = vset.pattern.permute.xlu0 0
  %548 = vperm.xlu0 %547, %v534
  %v549 = vpop.permute.xlu0 %548
  %552 = vset.pattern.permute.xlu0 0
  %553 = vperm.xlu0 %552, %v535
  %v554 = vpop.permute.xlu0 %553
  %v556 = vadd.f32 %v528, %v539
  %v557 = vadd.f32 %v529, %v544
  %v558 = vadd.f32 %v530, %v549
  %v559 = vadd.f32 %v531, %v554
  %v560 = vld [vmem:[%s1] sm:$0xff]
  %v561 = vld [vmem:[%s1 + $0x8] sm:$0xff]
  %v562 = vld [vmem:[%s1 + $0x10] sm:$0xff]
  %v563 = vld [vmem:[%s1 + $0x18] sm:$0xff]
  %v564 = vadd.f32 %v560, %v556
  %v565 = vadd.f32 %v561, %v557
  %v566 = vadd.f32 %v562, %v558
  %v567 = vadd.f32 %v563, %v559
  %v568 = vmax.f32 %v564, 0.0
  %v569 = vmax.f32 %v565, 0.0
  %v570 = vmax.f32 %v566, 0.0
  %v571 = vmax.f32 %v567, 0.0
  %572 = vst [vmem:[%s8] sm:$0xff] %v568
  %573 = vst [vmem:[%s8 + $0x8] sm:$0xff] %v569
  %574 = vst [vmem:[%s8 + $0x10] sm:$0xff] %v570
  %575 = vst [vmem:[%s8 + $0x18] sm:$0xff] %v571
  // Predicated region
  $region34: #{resblock_forward.1} parent=0 // pred_check
    _
  $region35: #{resblock_forward.1} parent=0 // pred_check_branch
    %577 = sbr.rel (0) target = $region37
  $region36: #{resblock_forward.1} parent=0 // pred_region
    _
  $region37: #{resblock_forward.1} parent=0 // pred_fallthru
    _
  // Predicated region
  $region38: #{resblock_forward.1} parent=0 // pred_check
    _
  $region39: #{resblock_forward.1} parent=0 // pred_check_branch
    %579 = sbr.rel (0) target = $region41
  $region40: #{resblock_forward.1} parent=0 // pred_region
    _
  $region41: #{resblock_forward.1} parent=0 // pred_fallthru
    _

</llo_original>
